<compile_context>
chip_gen: v6e
topology: v6e:2x2x1
jax: 0.10.0
libtpu: 0.0.40
codegen_flags: <defaults>
</compile_context>

<pallas_src>
import jax
import jax.numpy as jnp
from jax import lax
from jax.experimental import pallas as pl
from jax.experimental.pallas import tpu as pltpu

LN_EPS = 1e-5        # nn.LayerNorm default eps
NORM_EPS = 1e-12     # F.normalize default eps

# rows of the packed (16, hidden) param slab
_ROW_WB0 = 0          # rows 0..3 : W_bbox (4, hidden)
_ROW_BF = 4           # b_feat
_ROW_BB = 5           # b_bbox
_ROW_GF = 6           # gamma_feat
_ROW_BETF = 7         # beta_feat
_ROW_GB = 8           # gamma_bbox
_ROW_BETB = 9         # beta_bbox


def _round_up(x, m):
    return ((x + m - 1) // m) * m


def _object_encoder_kernel(boxes_ref, feats_ref, wf_ref, pv_ref, o_ref):
    pv = pv_ref[...]                                           # (16, hidden) f32

    # ---- object feature branch ----
    x = feats_ref[...].astype(jnp.float32)
    # F.normalize(x, dim=-1): x / max(||x||_2, eps) == x * rsqrt(max(sumsq, eps^2))
    ssq = jnp.sum(x * x, axis=-1, keepdims=True)
    x = x * lax.rsqrt(jnp.maximum(ssq, NORM_EPS * NORM_EPS))

    # MXU matmul; operands in the weight dtype (bf16 by default), f32 accumulation.
    hf = jnp.dot(x.astype(wf_ref.dtype), wf_ref[...],
                 preferred_element_type=jnp.float32) + pv[_ROW_BF:_ROW_BF + 1, :]
    mu = jnp.mean(hf, axis=-1, keepdims=True)
    df = hf - mu
    var = jnp.mean(df * df, axis=-1, keepdims=True)
    hf = df * lax.rsqrt(var + LN_EPS) * pv[_ROW_GF:_ROW_GF + 1, :] \
        + pv[_ROW_BETF:_ROW_BETF + 1, :]

    # ---- bbox branch: K=4 contraction as VPU broadcast-FMAs (skip the MXU) ----
    b = boxes_ref[...].astype(jnp.float32)                    # (rt, 4)
    hb = (b[:, 0:1] * pv[0:1, :]
          + b[:, 1:2] * pv[1:2, :]
          + b[:, 2:3] * pv[2:3, :]
          + b[:, 3:4] * pv[3:4, :]
          + pv[_ROW_BB:_ROW_BB + 1, :])
    mu2 = jnp.mean(hb, axis=-1, keepdims=True)
    db = hb - mu2
    var2 = jnp.mean(db * db, axis=-1, keepdims=True)
    hb = db * lax.rsqrt(var2 + LN_EPS) * pv[_ROW_GB:_ROW_GB + 1, :] \
        + pv[_ROW_BETB:_ROW_BETB + 1, :]

    # dropout is identity in eval mode
    o_ref[...] = (hf + hb).astype(o_ref.dtype)


def object_encoder(obj_boxes, obj_features, params, *, row_tile=512,
                   mxu_dtype=jnp.bfloat16, out_dtype=None):
    """obj_boxes: (B, S, 4), obj_features: (B, S, obj_in_dim) -> (B, S, hidden).

    mxu_dtype: dtype of the feature-matmul operands (bf16 default, f32 accum).
    out_dtype: output dtype (defaults to obj_features.dtype; pass bf16 to halve
               output HBM writeback if the consumer accepts it).
    """
    B, S, obj_in_dim = obj_features.shape
    hidden = params["w_feat"].shape[1]
    N = B * S
    out_dtype = obj_features.dtype if out_dtype is None else out_dtype

    # physical VMEM of the chip we're actually on (v5e/v6e: 128 MiB, v7x: 64 MiB),
    # with headroom for compiler-internal scratch.
    try:
        phys_vmem = int(pltpu.get_tpu_info().vmem_capacity_bytes)
    except Exception:
        phys_vmem = 64 * 1024 * 1024          # safe floor (v7x)
    vmem_cap = int(phys_vmem * 0.80)

    act_bytes = jnp.dtype(obj_features.dtype).itemsize
    w_bytes = jnp.dtype(mxu_dtype).itemsize
    out_bytes = jnp.dtype(out_dtype).itemsize

    def vmem_estimate(rt_):
        return (2 * rt_ * obj_in_dim * act_bytes   # feature tiles (double-buffered)
                + 2 * rt_ * 4 * act_bytes          # bbox tiles
                + obj_in_dim * hidden * w_bytes    # W_feat (single-buffered)
                + 16 * hidden * 4                  # packed params
                + 2 * rt_ * hidden * out_bytes     # output tiles
                + rt_ * obj_in_dim * 4             # in-kernel f32 upcast of features
                + 3 * rt_ * hidden * 4)            # hf / hb / LN temporaries

    # tile size: as large as possible (multiple of 8 sublanes; default 512 is a
    # multiple of the 256 MXU row), clamped to the row count.
    rt = max(8, _round_up(min(row_tile, N), 8))
    # keep >= 2 grid steps so both v7x TensorCores get work (harmless elsewhere).
    if pl.cdiv(N, rt) < 2 and N > 8:
        rt = _round_up(pl.cdiv(N, 2), 8)
    # shrink the tile if it would overflow the VMEM budget (large obj_in_dim).
    while rt > 8 and int(1.25 * vmem_estimate(rt)) > vmem_cap:
        rt = max(8, _round_up(rt // 2, 8))

    grid = (pl.cdiv(N, rt),)
    vmem_limit = int(min(max(int(1.5 * vmem_estimate(rt)), 32 * 1024 * 1024),
                         vmem_cap))

    # No jnp.pad: the ragged last block is masked by Pallas; OOB rows only ever
    # feed their own (discarded) output rows.
    boxes2d = obj_boxes.reshape(N, 4)
    feats2d = obj_features.reshape(N, obj_in_dim)

    w_feat = params["w_feat"].astype(mxu_dtype)

    # Pack W_bbox + the six per-feature vectors into one (16, hidden) f32 slab.
    pv = jnp.zeros((16, hidden), jnp.float32)
    pv = pv.at[0:4, :].set(params["w_bbox"].astype(jnp.float32))
    pv = pv.at[_ROW_BF, :].set(params["b_feat"].astype(jnp.float32))
    pv = pv.at[_ROW_BB, :].set(params["b_bbox"].astype(jnp.float32))
    pv = pv.at[_ROW_GF, :].set(params["gamma_feat"].astype(jnp.float32))
    pv = pv.at[_ROW_BETF, :].set(params["beta_feat"].astype(jnp.float32))
    pv = pv.at[_ROW_GB, :].set(params["gamma_bbox"].astype(jnp.float32))
    pv = pv.at[_ROW_BETB, :].set(params["beta_bbox"].astype(jnp.float32))

    def rows(i):        # row-tiled operands
        return (i, 0)

    def whole(i):       # operands replicated across the grid
        return (0, 0)

    out2d = pl.pallas_call(
        _object_encoder_kernel,
        out_shape=jax.ShapeDtypeStruct((N, hidden), out_dtype),
        grid_spec=pltpu.PrefetchScalarGridSpec(
            num_scalar_prefetch=0,
            grid=grid,
            in_specs=[
                pl.BlockSpec((rt, 4), rows),                  # boxes
                pl.BlockSpec((rt, obj_in_dim), rows),         # features
                pl.BlockSpec((obj_in_dim, hidden), whole,     # W_feat (resident)
                             pipeline_mode=pl.Buffered(1)),
                pl.BlockSpec((16, hidden), whole,             # packed params
                             pipeline_mode=pl.Buffered(1)),
            ],
            out_specs=pl.BlockSpec((rt, hidden), rows),
        ),
        compiler_params=pltpu.CompilerParams(
            dimension_semantics=("parallel",),
            vmem_limit_bytes=vmem_limit),
    )(boxes2d, feats2d, w_feat, pv)

    return out2d.reshape(B, S, hidden)


def init_params(key, obj_in_dim, hidden):
    k1, k2, k3, k4 = jax.random.split(key, 4)
    scale_f = 1.0 / jnp.sqrt(obj_in_dim)
    scale_b = 1.0 / jnp.sqrt(4.0)
    return {
        # stored as (in_dim, hidden) == torch weight.T
        "w_feat": jax.random.uniform(k1, (obj_in_dim, hidden), jnp.float32,
                                     -scale_f, scale_f),
        "b_feat": jax.random.uniform(k2, (hidden,), jnp.float32,
                                     -scale_f, scale_f),
        "w_bbox": jax.random.uniform(k3, (4, hidden), jnp.float32,
                                     -scale_b, scale_b),
        "b_bbox": jax.random.uniform(k4, (hidden,), jnp.float32,
                                     -scale_b, scale_b),
        "gamma_feat": jnp.ones((hidden,), jnp.float32),
        "beta_feat": jnp.zeros((hidden,), jnp.float32),
        "gamma_bbox": jnp.ones((hidden,), jnp.float32),
        "beta_bbox": jnp.zeros((hidden,), jnp.float32),
    }


def _reference(obj_boxes, obj_features, p):
    x = obj_features
    x = x / jnp.maximum(jnp.linalg.norm(x, axis=-1, keepdims=True), NORM_EPS)
    hf = x @ p["w_feat"] + p["b_feat"]
    mu = hf.mean(-1, keepdims=True)
    var = ((hf - mu) ** 2).mean(-1, keepdims=True)
    hf = (hf - mu) / jnp.sqrt(var + LN_EPS) * p["gamma_feat"] + p["beta_feat"]
    hb = obj_boxes @ p["w_bbox"] + p["b_bbox"]
    mu2 = hb.mean(-1, keepdims=True)
    var2 = ((hb - mu2) ** 2).mean(-1, keepdims=True)
    hb = (hb - mu2) / jnp.sqrt(var2 + LN_EPS) * p["gamma_bbox"] + p["beta_bbox"]
    return hf + hb


if __name__ == "__main__":
    OBJ_IN, HIDDEN = 64, 128
    key = jax.random.PRNGKey(0)
    kb, kf, kp = jax.random.split(key, 3)
    params = init_params(kp, OBJ_IN, HIDDEN)

    # case 1: B*S a multiple of the sublane size
    B, S = 2, 8
    obj_boxes = jax.random.uniform(kb, (B, S, 4), jnp.float32)
    obj_features = jax.random.normal(kf, (B, S, OBJ_IN), jnp.float32)
    ref = _reference(obj_boxes, obj_features, params)

    # f32-weight MXU path: tight agreement with the torch-style reference
    out_f32 = jax.block_until_ready(
        object_encoder(obj_boxes, obj_features, params, mxu_dtype=jnp.float32))
    assert out_f32.shape == (B, S, HIDDEN)
    assert jnp.allclose(out_f32, ref, atol=1e-4, rtol=1e-4)

    # default bf16-weight MXU path (f32 accumulation): looser tolerance
    out_bf16 = jax.block_until_ready(object_encoder(obj_boxes, obj_features, params))
    assert out_bf16.shape == (B, S, HIDDEN)
    assert jnp.allclose(out_bf16, ref, atol=5e-2, rtol=5e-2)

    # case 2: ragged row count -> exercises the masked ragged-last-block path
    # (no jnp.pad anywhere in the wrapper)
    B2, S2 = 3, 5
    kb2, kf2 = jax.random.split(jax.random.PRNGKey(1), 2)
    obj_boxes2 = jax.random.uniform(kb2, (B2, S2, 4), jnp.float32)
    obj_features2 = jax.random.normal(kf2, (B2, S2, OBJ_IN), jnp.float32)
    out2 = jax.block_until_ready(
        object_encoder(obj_boxes2, obj_features2, params, mxu_dtype=jnp.float32))
    ref2 = _reference(obj_boxes2, obj_features2, params)
    assert out2.shape == (B2, S2, HIDDEN)
    assert jnp.allclose(out2, ref2, atol=1e-4, rtol=1e-4)

    print("KERNEL_OK")
</pallas_src>

<mosaic_0001>
module attributes {stable_mosaic.version = 11 : i64} {
  func.func @_object_encoder_kernel(%arg0: i32, %arg1: memref<8x4xf32, #tpu.memory_space<vmem>>, %arg2: memref<8x64xf32, #tpu.memory_space<vmem>>, %arg3: memref<64x128xf32, #tpu.memory_space<vmem>>, %arg4: memref<16x128xf32, #tpu.memory_space<vmem>>, %arg5: memref<8x128xf32, #tpu.memory_space<vmem>>) attributes {dimension_semantics = [#tpu.dimension_semantics<parallel>], iteration_bounds = array<i64: 2>, scalar_prefetch = 0 : i64, scratch_operands = 0 : i64, tpu.core_type = #tpu.core_type<tc>, window_params = [{transform_indices = @transform_0, window_bounds = array<i64: 8, 4>}, {transform_indices = @transform_1, window_bounds = array<i64: 8, 64>}, {pipeline_mode = #tpu.pipeline_mode<synchronous>, transform_indices = @transform_2, window_bounds = array<i64: 64, 128>}, {pipeline_mode = #tpu.pipeline_mode<synchronous>, transform_indices = @transform_3, window_bounds = array<i64: 16, 128>}, {transform_indices = @transform_4, window_bounds = array<i64: 8, 128>}]} {
    %c0 = arith.constant 0 : index
    %c0_0 = arith.constant 0 : index
    %0 = vector.load %arg4[%c0, %c0_0] : memref<16x128xf32, #tpu.memory_space<vmem>>, vector<16x128xf32>
    %c0_1 = arith.constant 0 : index
    %c0_2 = arith.constant 0 : index
    %1 = vector.load %arg2[%c0_1, %c0_2] : memref<8x64xf32, #tpu.memory_space<vmem>>, vector<8x64xf32>
    %2 = arith.mulf %1, %1 : vector<8x64xf32>
    %cst = arith.constant dense<0.000000e+00> : vector<8xf32>
    %3 = vector.multi_reduction <add>, %2, %cst [1] : vector<8x64xf32> to vector<8xf32>
    %4 = vector.shape_cast %3 : vector<8xf32> to vector<8x1xf32>
    %cst_3 = arith.constant 1.000000e-24 : f32
    %5 = vector.broadcast %cst_3 : f32 to vector<8x1xf32>
    %6 = arith.maximumf %4, %5 : vector<8x1xf32>
    %7 = math.rsqrt %6 : vector<8x1xf32>
    %8 = vector.broadcast %7 : vector<8x1xf32> to vector<8x64xf32>
    %9 = arith.mulf %1, %8 : vector<8x64xf32>
    %c0_4 = arith.constant 0 : index
    %c0_5 = arith.constant 0 : index
    %10 = vector.load %arg3[%c0_4, %c0_5] : memref<64x128xf32, #tpu.memory_space<vmem>>, vector<64x128xf32>
    %cst_6 = arith.constant dense<0.000000e+00> : vector<8x128xf32>
    %11 = tpu.matmul %9, %10, %cst_6 {dimension_numbers = #tpu.dot_dimension_numbers<[1], [0], [0], [1], [0, 0, 1, 1], [], []>} : vector<8x64xf32>, vector<64x128xf32>, vector<8x128xf32> -> vector<8x128xf32>
    %12 = vector.extract_strided_slice %0 {offsets = [4, 0], sizes = [1, 128], strides = [1, 1]} : vector<16x128xf32> to vector<1x128xf32>
    %13 = vector.broadcast %12 : vector<1x128xf32> to vector<8x128xf32>
    %14 = arith.addf %11, %13 : vector<8x128xf32>
    %cst_7 = arith.constant dense<0.000000e+00> : vector<8xf32>
    %15 = vector.multi_reduction <add>, %14, %cst_7 [1] : vector<8x128xf32> to vector<8xf32>
    %16 = vector.shape_cast %15 : vector<8xf32> to vector<8x1xf32>
    %cst_8 = arith.constant 1.280000e+02 : f32
    %17 = vector.broadcast %cst_8 : f32 to vector<8x1xf32>
    %18 = arith.divf %16, %17 : vector<8x1xf32>
    %19 = vector.broadcast %18 : vector<8x1xf32> to vector<8x128xf32>
    %20 = arith.subf %14, %19 : vector<8x128xf32>
    %21 = arith.mulf %20, %20 : vector<8x128xf32>
    %cst_9 = arith.constant dense<0.000000e+00> : vector<8xf32>
    %22 = vector.multi_reduction <add>, %21, %cst_9 [1] : vector<8x128xf32> to vector<8xf32>
    %23 = vector.shape_cast %22 : vector<8xf32> to vector<8x1xf32>
    %cst_10 = arith.constant 1.280000e+02 : f32
    %24 = vector.broadcast %cst_10 : f32 to vector<8x1xf32>
    %25 = arith.divf %23, %24 : vector<8x1xf32>
    %cst_11 = arith.constant 9.99999974E-6 : f32
    %26 = vector.broadcast %cst_11 : f32 to vector<8x1xf32>
    %27 = arith.addf %25, %26 : vector<8x1xf32>
    %28 = math.rsqrt %27 : vector<8x1xf32>
    %29 = vector.broadcast %28 : vector<8x1xf32> to vector<8x128xf32>
    %30 = arith.mulf %20, %29 : vector<8x128xf32>
    %31 = vector.extract_strided_slice %0 {offsets = [6, 0], sizes = [1, 128], strides = [1, 1]} : vector<16x128xf32> to vector<1x128xf32>
    %32 = vector.broadcast %31 : vector<1x128xf32> to vector<8x128xf32>
    %33 = arith.mulf %30, %32 : vector<8x128xf32>
    %34 = vector.extract_strided_slice %0 {offsets = [7, 0], sizes = [1, 128], strides = [1, 1]} : vector<16x128xf32> to vector<1x128xf32>
    %35 = vector.broadcast %34 : vector<1x128xf32> to vector<8x128xf32>
    %36 = arith.addf %33, %35 : vector<8x128xf32>
    %c0_12 = arith.constant 0 : index
    %c0_13 = arith.constant 0 : index
    %37 = vector.load %arg1[%c0_12, %c0_13] : memref<8x4xf32, #tpu.memory_space<vmem>>, vector<8x4xf32>
    %38 = vector.extract_strided_slice %37 {offsets = [0, 0], sizes = [8, 1], strides = [1, 1]} : vector<8x4xf32> to vector<8x1xf32>
    %39 = vector.extract_strided_slice %0 {offsets = [0, 0], sizes = [1, 128], strides = [1, 1]} : vector<16x128xf32> to vector<1x128xf32>
    %40 = vector.broadcast %38 : vector<8x1xf32> to vector<8x128xf32>
    %41 = vector.broadcast %39 : vector<1x128xf32> to vector<8x128xf32>
    %42 = arith.mulf %40, %41 : vector<8x128xf32>
    %43 = vector.extract_strided_slice %37 {offsets = [0, 1], sizes = [8, 1], strides = [1, 1]} : vector<8x4xf32> to vector<8x1xf32>
    %44 = vector.extract_strided_slice %0 {offsets = [1, 0], sizes = [1, 128], strides = [1, 1]} : vector<16x128xf32> to vector<1x128xf32>
    %45 = vector.broadcast %43 : vector<8x1xf32> to vector<8x128xf32>
    %46 = vector.broadcast %44 : vector<1x128xf32> to vector<8x128xf32>
    %47 = arith.mulf %45, %46 : vector<8x128xf32>
    %48 = arith.addf %42, %47 : vector<8x128xf32>
    %49 = vector.extract_strided_slice %37 {offsets = [0, 2], sizes = [8, 1], strides = [1, 1]} : vector<8x4xf32> to vector<8x1xf32>
    %50 = vector.extract_strided_slice %0 {offsets = [2, 0], sizes = [1, 128], strides = [1, 1]} : vector<16x128xf32> to vector<1x128xf32>
    %51 = vector.broadcast %49 : vector<8x1xf32> to vector<8x128xf32>
    %52 = vector.broadcast %50 : vector<1x128xf32> to vector<8x128xf32>
    %53 = arith.mulf %51, %52 : vector<8x128xf32>
    %54 = arith.addf %48, %53 : vector<8x128xf32>
    %55 = vector.extract_strided_slice %37 {offsets = [0, 3], sizes = [8, 1], strides = [1, 1]} : vector<8x4xf32> to vector<8x1xf32>
    %56 = vector.extract_strided_slice %0 {offsets = [3, 0], sizes = [1, 128], strides = [1, 1]} : vector<16x128xf32> to vector<1x128xf32>
    %57 = vector.broadcast %55 : vector<8x1xf32> to vector<8x128xf32>
    %58 = vector.broadcast %56 : vector<1x128xf32> to vector<8x128xf32>
    %59 = arith.mulf %57, %58 : vector<8x128xf32>
    %60 = arith.addf %54, %59 : vector<8x128xf32>
    %61 = vector.extract_strided_slice %0 {offsets = [5, 0], sizes = [1, 128], strides = [1, 1]} : vector<16x128xf32> to vector<1x128xf32>
    %62 = vector.broadcast %61 : vector<1x128xf32> to vector<8x128xf32>
    %63 = arith.addf %60, %62 : vector<8x128xf32>
    %cst_14 = arith.constant dense<0.000000e+00> : vector<8xf32>
    %64 = vector.multi_reduction <add>, %63, %cst_14 [1] : vector<8x128xf32> to vector<8xf32>
    %65 = vector.shape_cast %64 : vector<8xf32> to vector<8x1xf32>
    %cst_15 = arith.constant 1.280000e+02 : f32
    %66 = vector.broadcast %cst_15 : f32 to vector<8x1xf32>
    %67 = arith.divf %65, %66 : vector<8x1xf32>
    %68 = vector.broadcast %67 : vector<8x1xf32> to vector<8x128xf32>
    %69 = arith.subf %63, %68 : vector<8x128xf32>
    %70 = arith.mulf %69, %69 : vector<8x128xf32>
    %cst_16 = arith.constant dense<0.000000e+00> : vector<8xf32>
    %71 = vector.multi_reduction <add>, %70, %cst_16 [1] : vector<8x128xf32> to vector<8xf32>
    %72 = vector.shape_cast %71 : vector<8xf32> to vector<8x1xf32>
    %cst_17 = arith.constant 1.280000e+02 : f32
    %73 = vector.broadcast %cst_17 : f32 to vector<8x1xf32>
    %74 = arith.divf %72, %73 : vector<8x1xf32>
    %cst_18 = arith.constant 9.99999974E-6 : f32
    %75 = vector.broadcast %cst_18 : f32 to vector<8x1xf32>
    %76 = arith.addf %74, %75 : vector<8x1xf32>
    %77 = math.rsqrt %76 : vector<8x1xf32>
    %78 = vector.broadcast %77 : vector<8x1xf32> to vector<8x128xf32>
    %79 = arith.mulf %69, %78 : vector<8x128xf32>
    %80 = vector.extract_strided_slice %0 {offsets = [8, 0], sizes = [1, 128], strides = [1, 1]} : vector<16x128xf32> to vector<1x128xf32>
    %81 = vector.broadcast %80 : vector<1x128xf32> to vector<8x128xf32>
    %82 = arith.mulf %79, %81 : vector<8x128xf32>
    %83 = vector.extract_strided_slice %0 {offsets = [9, 0], sizes = [1, 128], strides = [1, 1]} : vector<16x128xf32> to vector<1x128xf32>
    %84 = vector.broadcast %83 : vector<1x128xf32> to vector<8x128xf32>
    %85 = arith.addf %82, %84 : vector<8x128xf32>
    %86 = arith.addf %36, %85 : vector<8x128xf32>
    %c0_19 = arith.constant 0 : index
    %c0_20 = arith.constant 0 : index
    %87 = vector.load %arg5[%c0_19, %c0_20] : memref<8x128xf32, #tpu.memory_space<vmem>>, vector<8x128xf32>
    tpu.vector_store %arg5[%c0_19, %c0_20], %86 {strides = array<i32>} : memref<8x128xf32, #tpu.memory_space<vmem>>, vector<8x128xf32>,
    return
  }
  func.func @transform_0(%arg0: i32) -> (i32, i32) {
    %c0_i32 = arith.constant 0 : i32
    %c0_i32_0 = arith.constant 0 : i32
    return %arg0, %c0_i32 : i32, i32
  }
  func.func @transform_1(%arg0: i32) -> (i32, i32) {
    %c0_i32 = arith.constant 0 : i32
    %c0_i32_0 = arith.constant 0 : i32
    return %arg0, %c0_i32 : i32, i32
  }
  func.func @transform_2(%arg0: i32) -> (i32, i32) {
    %c0_i32 = arith.constant 0 : i32
    %c0_i32_0 = arith.constant 0 : i32
    %c0_i32_1 = arith.constant 0 : i32
    return %c0_i32, %c0_i32_0 : i32, i32
  }
  func.func @transform_3(%arg0: i32) -> (i32, i32) {
    %c0_i32 = arith.constant 0 : i32
    %c0_i32_0 = arith.constant 0 : i32
    %c0_i32_1 = arith.constant 0 : i32
    return %c0_i32, %c0_i32_0 : i32, i32
  }
  func.func @transform_4(%arg0: i32) -> (i32, i32) {
    %c0_i32 = arith.constant 0 : i32
    %c0_i32_0 = arith.constant 0 : i32
    return %arg0, %c0_i32 : i32, i32
  }
}

</mosaic_0001>

<llo_original>
// kernel: tpu_custom_call.1
$region0: #{tpu_custom_call.1}
  #allocation0 [shape = 'u32[]', space=smem, size = 0x4, offset = 0x4, fixed_abs, tag = 'smem constant byte address 0x4 - core index']
  #allocation1 [shape = 'u32[144,128]{1,0:T(1,128)}', space=vmem, size = 0x12000, scoped, tag = 'internal scratch']
  %s0 = inlined_call_operand.vmem [shape: f32[16,4], index: 0, kind: input, shape index: {}]
  %s1 = inlined_call_operand.vmem [shape: f32[16,64], index: 1, kind: input, shape index: {}]
  %s2 = inlined_call_operand.hbm [shape: f32[64,128], index: 2, kind: input, shape index: {}]
  %s3 = inlined_call_operand.hbm [shape: f32[16,128], index: 3, kind: input, shape index: {}]
  %s4 = inlined_call_operand.hbm [shape: f32[16,128], index: 4, kind: output, shape index: {}]
  %s5 = sld [smem:[#allocation0]]
  $region57: #{tpu_custom_call.1} parent=0
    _
  %s7 = ssub.s32 1, %s5
  %s8 = scalar_select 0, %s7, %s5
  $region1: #{tpu_custom_call.1} parent=0
    #allocation2 [shape = 'u8[32768]{0}', space=vmem, size = 0x8000, scoped, tag = 'input window, operand 2, single buffered']
    #allocation3 [shape = 's32[2]{0}', space=sflag, size = 0x8, scoped, tag = 'scoped memory for tpu_custom_call.1']
    #allocation4 [shape = 's32[2]{0}', space=sflag, size = 0x8, scoped, tag = 'scoped memory for tpu_custom_call.1']
    #allocation5 [shape = 'u8[8192]{0}', space=vmem, size = 0x2000, scoped, tag = 'input window, operand 3, single buffered']
    #allocation6 [shape = 's32[1]{0}', space=sflag, size = 0x4, scoped, tag = 'scoped memory for tpu_custom_call.1']
    #allocation7 [shape = 'u8[8192]{0}', space=vmem, size = 0x2000, scoped, tag = 'output window, operand 0']
    %9 = vsyncpa [#allocation3], 0
    %10 = vsyncpa [#allocation6], 0
    %11 = vsyncpa [#allocation4], 0
    %s12 = scalar_lea.sflag [#allocation4], 1
    %13 = vsyncpa %s12, 0
    loop: start=0, step=1, limit=4
    $region2: #{tpu_custom_call.1} parent=1 // loop_pre_header
      _
    $region3: #{tpu_custom_call.1} parent=1 // loop_header
      %s15 = sphi 0, %s19
      %p16 = scmp.ge.s32.totalorder %s15, 4
      %s25 = sphi 0, %s27
      %s28 = sphi 0, %s25
      %s29 = sphi 0, %s28
      %s45 = sphi 0, %s29
      %s51 = sphi 0, %s53
      %s54 = sphi 0, %s51
      %s55 = sphi 0, %s54
      %s71 = sphi 0, %s55
      %s75 = sphi 0, %s75
      %s77 = sphi 0, %s75
      %s78 = sphi 0, %s77
      %s92 = sphi 0, %s78
      %s96 = sphi 0, %s96
      %s98 = sphi 0, %s96
      %s99 = sphi 0, %s98
      %s113 = sphi 0, %s99
      %s119 = sphi 0, %s121
      %s122 = sphi 0, %s119
      %s123 = sphi 0, %s122
      %s139 = sphi 0, %s123
    $region4: #{tpu_custom_call.1} parent=1 // loop_header_branch
      %18 = sbr.rel (%p16) target = $region8
    $region5: #{tpu_custom_call.1} parent=1 // loop_body
      %s20 = ssub.s32 %s15, 1
      %s21 = ssub.s32 %s15, 2
      %s22 = sadd.s32 %s15, 1
      %s23 = ssub.s32 %s15, %s22
      %p24 = scmp.eq.s32.totalorder %s23, 0
      %s26 = sadd.s32 %s25, 1
      %s27 = scalar_select %p24, %s25, %s26
      %p30 = pneg %p24
      %p31 = scmp.eq.s32.totalorder %s15, 1
      %p32 = por %p30, %p31
      %p33 = scmp.ne.s32.totalorder %s25, %s28
      %p34 = scmp.eq.s32.totalorder %s15, 0
      %p35 = por %p33, %p34
      %p36 = scmp.ne.s32.totalorder %s25, %s28
      %p37 = scmp.eq.s32.totalorder %s20, 1
      %p38 = por %p36, %p37
      %p39 = scmp.ne.s32.totalorder %s28, %s29
      %p40 = scmp.eq.s32.totalorder %s20, 0
      %p41 = por %p39, %p40
      %p42 = scmp.ne.s32.totalorder %s28, %s29
      %p43 = scmp.eq.s32.totalorder %s21, 1
      %p44 = por %p42, %p43
      %p46 = scmp.ne.s32.totalorder %s29, %s45
      %p47 = scmp.eq.s32.totalorder %s21, 0
      %p48 = por %p46, %p47
      %s49 = ssub.s32 %s15, %s22
      %p50 = scmp.eq.s32.totalorder %s49, 0
      %s52 = sadd.s32 %s51, 1
      %s53 = scalar_select %p50, %s51, %s52
      %p56 = pneg %p50
      %p57 = scmp.eq.s32.totalorder %s15, 1
      %p58 = por %p56, %p57
      %p59 = scmp.ne.s32.totalorder %s51, %s54
      %p60 = scmp.eq.s32.totalorder %s15, 0
      %p61 = por %p59, %p60
      %p62 = scmp.ne.s32.totalorder %s51, %s54
      %p63 = scmp.eq.s32.totalorder %s20, 1
      %p64 = por %p62, %p63
      %p65 = scmp.ne.s32.totalorder %s54, %s55
      %p66 = scmp.eq.s32.totalorder %s20, 0
      %p67 = por %p65, %p66
      %p68 = scmp.ne.s32.totalorder %s54, %s55
      %p69 = scmp.eq.s32.totalorder %s21, 1
      %p70 = por %p68, %p69
      %p72 = scmp.ne.s32.totalorder %s55, %s71
      %p73 = scmp.eq.s32.totalorder %s21, 0
      %p74 = por %p72, %p73
      %s76 = sadd.s32 %s75, 1
      %p79 = scmp.eq.s32.totalorder %s15, 1
      %p80 = scmp.ne.s32.totalorder %s75, %s77
      %p81 = scmp.eq.s32.totalorder %s15, 0
      %p82 = por %p80, %p81
      %p83 = scmp.ne.s32.totalorder %s75, %s77
      %p84 = scmp.eq.s32.totalorder %s20, 1
      %p85 = por %p83, %p84
      %p86 = scmp.ne.s32.totalorder %s77, %s78
      %p87 = scmp.eq.s32.totalorder %s20, 0
      %p88 = por %p86, %p87
      %p89 = scmp.ne.s32.totalorder %s77, %s78
      %p90 = scmp.eq.s32.totalorder %s21, 1
      %p91 = por %p89, %p90
      %p93 = scmp.ne.s32.totalorder %s78, %s92
      %p94 = scmp.eq.s32.totalorder %s21, 0
      %p95 = por %p93, %p94
      %s97 = sadd.s32 %s96, 1
      %p100 = scmp.eq.s32.totalorder %s15, 1
      %p101 = scmp.ne.s32.totalorder %s96, %s98
      %p102 = scmp.eq.s32.totalorder %s15, 0
      %p103 = por %p101, %p102
      %p104 = scmp.ne.s32.totalorder %s96, %s98
      %p105 = scmp.eq.s32.totalorder %s20, 1
      %p106 = por %p104, %p105
      %p107 = scmp.ne.s32.totalorder %s98, %s99
      %p108 = scmp.eq.s32.totalorder %s20, 0
      %p109 = por %p107, %p108
      %p110 = scmp.ne.s32.totalorder %s98, %s99
      %p111 = scmp.eq.s32.totalorder %s21, 1
      %p112 = por %p110, %p111
      %p114 = scmp.ne.s32.totalorder %s99, %s113
      %p115 = scmp.eq.s32.totalorder %s21, 0
      %p116 = por %p114, %p115
      %s117 = ssub.s32 %s15, %s22
      %p118 = scmp.eq.s32.totalorder %s117, 0
      %s120 = sadd.s32 %s119, 1
      %s121 = scalar_select %p118, %s119, %s120
      %p124 = pneg %p118
      %p125 = scmp.eq.s32.totalorder %s15, 1
      %p126 = por %p124, %p125
      %p127 = scmp.ne.s32.totalorder %s119, %s122
      %p128 = scmp.eq.s32.totalorder %s15, 0
      %p129 = por %p127, %p128
      %p130 = scmp.ne.s32.totalorder %s119, %s122
      %p131 = scmp.eq.s32.totalorder %s20, 1
      %p132 = por %p130, %p131
      %p133 = scmp.ne.s32.totalorder %s122, %s123
      %p134 = scmp.eq.s32.totalorder %s20, 0
      %p135 = por %p133, %p134
      %p136 = scmp.ne.s32.totalorder %s122, %s123
      %p137 = scmp.eq.s32.totalorder %s21, 1
      %p138 = por %p136, %p137
      %p140 = scmp.ne.s32.totalorder %s123, %s139
      %p141 = scmp.eq.s32.totalorder %s21, 0
      %p142 = por %p140, %p141
      %p143 = scmp.le.s32.totalorder 1, %s15
      %p144 = scmp.lt.s32.totalorder %s15, 3
      %p145 = pnand %p143, %p144
      %p146 = pneg %p145
      // Predicated region
      $region9: #{tpu_custom_call.1} parent=5 // pred_check
        _
      $region10: #{tpu_custom_call.1} parent=5 // pred_check_branch
        %148 = sbr.rel (%p145) target = $region12
      $region11: #{tpu_custom_call.1} parent=5 // pred_region
        %s149 = ssub.s32 %s15, 1
        // Predicated region
        $region13: #{tpu_custom_call.1} parent=11 // pred_check
          %p150 = pneg %p88
        $region14: #{tpu_custom_call.1} parent=11 // pred_check_branch
          %152 = sbr.rel (%p150) target = $region16
        $region15: #{tpu_custom_call.1} parent=11 // pred_region
          %s154 = ssub.s32 1024, 1024
          %155 = vsyncadd [#allocation3], %s154
          %s156 = sshll.u32 [#allocation2], 4
          %s157 = int_to_ptr.vmem [resolvable:$true] %s156
          %162 = dma.hbm_to_vmem [thread:$0]  %s2, 1024, %s157, [#allocation3], 128, 128, 8
        $region16: #{tpu_custom_call.1} parent=11 // pred_fallthru
          _
        // Predicated region
        $region17: #{tpu_custom_call.1} parent=11 // pred_check
          %p163 = pneg %p109
        $region18: #{tpu_custom_call.1} parent=11 // pred_check_branch
          %165 = sbr.rel (%p163) target = $region20
        $region19: #{tpu_custom_call.1} parent=11 // pred_region
          %s167 = ssub.s32 256, 256
          %168 = vsyncadd [#allocation6], %s167
          %s169 = sshll.u32 [#allocation5], 4
          %s170 = int_to_ptr.vmem [resolvable:$true] %s169
          %175 = dma.hbm_to_vmem [thread:$0]  %s3, 256, %s170, [#allocation6], 128, 128, 8
        $region20: #{tpu_custom_call.1} parent=11 // pred_fallthru
          _
      $region12: #{tpu_custom_call.1} parent=5 // pred_fallthru
        _
      %p176 = scmp.lt.s32.totalorder %s15, 2
      // Predicated region
      $region21: #{tpu_custom_call.1} parent=5 // pred_check
        %p177 = pneg %p176
      $region22: #{tpu_custom_call.1} parent=5 // pred_check_branch
        %179 = sbr.rel (%p177) target = $region24
      $region23: #{tpu_custom_call.1} parent=5 // pred_region
        // Predicated region
        $region25: #{tpu_custom_call.1} parent=23 // pred_check
          %p180 = pneg %p35
        $region26: #{tpu_custom_call.1} parent=23 // pred_check_branch
          %182 = sbr.rel (%p180) target = $region28
        $region27: #{tpu_custom_call.1} parent=23 // pred_region
          %p183 = scmp.lt.s32.totalorder %s15, 1
          %s184 = scalar_select %p183, %s15, 1
          %s185 = smul.addr %s184, 8
          %s186 = scalar_lea.vmem %s0, %s185
        $region28: #{tpu_custom_call.1} parent=23 // pred_fallthru
          _
        // Predicated region
        $region29: #{tpu_custom_call.1} parent=23 // pred_check
          %p187 = pneg %p61
        $region30: #{tpu_custom_call.1} parent=23 // pred_check_branch
          %189 = sbr.rel (%p187) target = $region32
        $region31: #{tpu_custom_call.1} parent=23 // pred_region
          %p190 = scmp.lt.s32.totalorder %s15, 1
          %s191 = scalar_select %p190, %s15, 1
          %s192 = smul.addr %s191, 8
          %s193 = scalar_lea.vmem %s1, %s192
        $region32: #{tpu_custom_call.1} parent=23 // pred_fallthru
          _
      $region24: #{tpu_custom_call.1} parent=5 // pred_fallthru
        _
      %p194 = scmp.le.s32.totalorder 1, %s15
      %p195 = scmp.lt.s32.totalorder %s15, 3
      %p196 = pnand %p194, %p195
      %p197 = pneg %p196
      // Predicated region
      $region33: #{tpu_custom_call.1} parent=5 // pred_check
        _
      $region34: #{tpu_custom_call.1} parent=5 // pred_check_branch
        %199 = sbr.rel (%p196) target = $region36
      $region35: #{tpu_custom_call.1} parent=5 // pred_region
        %s200 = ssub.s32 %s15, 1
        // Predicated region
        $region37: #{tpu_custom_call.1} parent=35 // pred_check
          %p201 = pneg %p88
        $region38: #{tpu_custom_call.1} parent=35 // pred_check_branch
          %203 = sbr.rel (%p201) target = $region40
        $region39: #{tpu_custom_call.1} parent=35 // pred_region
          %204 = dma.done [#allocation3], 1024
        $region40: #{tpu_custom_call.1} parent=35 // pred_fallthru
          _
        // Predicated region
        $region41: #{tpu_custom_call.1} parent=35 // pred_check
          %p205 = pneg %p109
        $region42: #{tpu_custom_call.1} parent=35 // pred_check_branch
          %207 = sbr.rel (%p205) target = $region44
        $region43: #{tpu_custom_call.1} parent=35 // pred_region
          %208 = dma.done [#allocation6], 256
        $region44: #{tpu_custom_call.1} parent=35 // pred_fallthru
          _
        %p209 = scmp.lt.s32.totalorder %s20, 1
        %s210 = scalar_select %p209, %s20, 1
        %s211 = smul.addr %s210, 8
        %s212 = scalar_lea.vmem %s0, %s211
        %p213 = pneg %p41
        %p214 = pneg %p38
        %p215 = scmp.lt.s32.totalorder %s20, 1
        %s216 = scalar_select %p215, %s20, 1
        %s217 = smul.addr %s216, 8
        %s218 = scalar_lea.vmem %s1, %s217
        %p219 = pneg %p67
        %p220 = pneg %p64
        %p221 = pneg %p88
        %p222 = pneg %p85
        %p223 = pneg %p109
        %p224 = pneg %p106
        %p225 = pneg %p135
        %p226 = pneg %p132
        %s227 = sand.u32 %s122, 1
        %s228 = scalar_lea.sflag [#allocation4], %s227
        %s229 = sand.u32 %s122, 1
        %s230 = smul.addr %s229, 8
        %s231 = scalar_lea.vmem [#allocation7], %s230
        %p232 = scmp.lt.s32.totalorder %s20, 1
        %s233 = scalar_select %p232, %s20, 1
        %s234 = smul.addr %s233, 8
        %s235 = scalar_lea.vmem %s0, %s234
        %p236 = scmp.lt.s32.totalorder %s20, 1
        %s237 = scalar_select %p236, %s20, 1
        %s238 = smul.addr %s237, 8
        %s239 = scalar_lea.vmem %s1, %s238
        %v240 = vld [vmem:[#allocation5] sm:$0xff]
        %v241 = vld [vmem:[#allocation5 + $0x8] sm:$0xff]
        %v242 = vld [vmem:[%s239] sm:$0xff]
        %v243 = vmul.f32 %v242, %v242
        %vm244 = vcmask 523264
        %v245 = vsel %vm244, %v243, 0.0
        %246 = vadd.xlane.f32.xlu0 %v245
        %v247 = vpop.xlane.xlu0 %246
        %v248 = vmax.f32 %v247, 1e-24
        %v249 = vrsqrt.pop %v248
        %v250 = vmul.f32 %v242, %v249
        %v251 = vld [vmem:[#allocation2] sm:$0xff]
        %v252 = vld [vmem:[#allocation2 + $0x8] sm:$0xff]
        %v253 = vld [vmem:[#allocation2 + $0x10] sm:$0xff]
        %v254 = vld [vmem:[#allocation2 + $0x18] sm:$0xff]
        %v255 = vld [vmem:[#allocation2 + $0x20] sm:$0xff]
        %v256 = vld [vmem:[#allocation2 + $0x28] sm:$0xff]
        %v257 = vld [vmem:[#allocation2 + $0x30] sm:$0xff]
        %v258 = vld [vmem:[#allocation2 + $0x38] sm:$0xff]
        %v259 = vlaneseq
        %v260 = vshrl.u32 %v259, 7
        %v261 = vsub.s32 4, %v260
        %v262 = vrot.slane %v240, %v261
        %v264 = vsel %vm244, %v250, 0
        %266 = vmatprep.subr.mxu0 0.0
        %267 = vmatpush1.msra.mxu0 0.0
        %268 = vmatprep.subr.mxu0 0.0
        %269 = vmatpush1.msra.mxu0 0.0
        %270 = vmatprep.subr.mxu0 0.0
        %271 = vmatpush1.msra.mxu0 0.0
        %272 = vmatprep.subr.mxu0 0.0
        %273 = vmatpush1.msra.mxu0 0.0
        %274 = vmatprep.subr.mxu0 0.0
        %275 = vmatpush1.msra.mxu0 0.0
        %276 = vmatprep.subr.mxu0 0.0
        %277 = vmatpush1.msra.mxu0 0.0
        %278 = vmatprep.subr.mxu0 0.0
        %279 = vmatpush1.msra.mxu0 0.0
        %280 = vmatprep.subr.mxu0 0.0
        %281 = vmatpush1.msra.mxu0 0.0
        %282 = vmatprep.subr.mxu0 0.0
        %283 = vmatpush1.msra.mxu0 %v258
        %284 = vmatprep.subr.mxu0 0.0
        %285 = vmatpush1.msra.mxu0 %v257
        %286 = vmatprep.subr.mxu0 0.0
        %287 = vmatpush1.msra.mxu0 %v256
        %288 = vmatprep.subr.mxu0 0.0
        %289 = vmatpush1.msra.mxu0 %v255
        %290 = vmatprep.subr.mxu0 0.0
        %291 = vmatpush1.msra.mxu0 %v254
        %292 = vmatprep.subr.mxu0 0.0
        %293 = vmatpush1.msra.mxu0 %v253
        %294 = vmatprep.subr.mxu0 0.0
        %295 = vmatpush1.msra.mxu0 %v252
        %296 = vmatprep.subr.mxu0 0.0
        %297 = vmatpush1.msra.mxu0 %v251
        %298 = vmatprep.subr.mxu0 0.0
        %299 = vmatpush2.msra.mxu0 0.0
        %300 = vmatprep.subr.mxu0 0.0
        %301 = vmatpush2.msra.mxu0 0.0
        %302 = vmatprep.subr.mxu0 0.0
        %303 = vmatpush2.msra.mxu0 0.0
        %304 = vmatprep.subr.mxu0 0.0
        %305 = vmatpush2.msra.mxu0 0.0
        %306 = vmatprep.subr.mxu0 0.0
        %307 = vmatpush2.msra.mxu0 0.0
        %308 = vmatprep.subr.mxu0 0.0
        %309 = vmatpush2.msra.mxu0 0.0
        %310 = vmatprep.subr.mxu0 0.0
        %311 = vmatpush2.msra.mxu0 0.0
        %312 = vmatprep.subr.mxu0 0.0
        %313 = vmatpush2.msra.mxu0 0.0
        %314 = vmatprep.subr.mxu0 0.0
        %315 = vmatpush2.msra.mxu0 0.0
        %316 = vmatprep.subr.mxu0 0.0
        %317 = vmatpush2.msra.mxu0 0.0
        %318 = vmatprep.subr.mxu0 0.0
        %319 = vmatpush2.msra.mxu0 0.0
        %320 = vmatprep.subr.mxu0 0.0
        %321 = vmatpush2.msra.mxu0 0.0
        %322 = vmatprep.subr.mxu0 0.0
        %323 = vmatpush2.msra.mxu0 0.0
        %324 = vmatprep.subr.mxu0 0.0
        %325 = vmatpush2.msra.mxu0 0.0
        %326 = vmatprep.subr.mxu0 0.0
        %327 = vmatpush2.msra.mxu0 0.0
        %328 = vmatprep.subr.mxu0 0.0
        %329 = vmatpush2.msra.mxu0 0.0
        %330 = vmatprep.mubr.f32.mxu0 0.0
        %331 = vmatmul.mubr.f32.gmra.mxu0 %v264
        %v332 = vpop.f32.mrf.mxu0
        %v333 = vadd.f32 %v262, %v332
        %v334 = vpop.f32.mrf.mxu0
        %335 = vdwg.mxu0
        %336 = vadd.xlane.f32.xlu0 %v333
        %v337 = vpop.xlane.xlu0 %336
        %v338 = vrcp.pop 128.0
        %v339 = vmul.f32 %v337, %v338
        %v340 = vsub.f32 %v333, %v339
        %v341 = vmul.f32 %v340, %v340
        %342 = vadd.xlane.f32.xlu0 %v341
        %v343 = vpop.xlane.xlu0 %342
        %v344 = vmul.f32 %v343, %v338
        %v345 = vadd.f32 %v344, 1e-05
        %v346 = vrsqrt.pop %v345
        %v347 = vmul.f32 %v340, %v346
        %v348 = vlaneseq
        %v349 = vshrl.u32 %v348, 7
        %v350 = vsub.s32 6, %v349
        %v351 = vrot.slane %v240, %v350
        %v352 = vmul.f32 %v347, %v351
        %v353 = vlaneseq
        %v354 = vshrl.u32 %v353, 7
        %v355 = vsub.s32 7, %v354
        %v356 = vrot.slane %v240, %v355
        %v357 = vadd.f32 %v352, %v356
        %v358 = vld [vmem:[%s235] sm:$0xff]
        %360 = vset.pattern.permute.xlu0 0
        %361 = vperm.xlu0 %360, %v358
        %v362 = vpop.permute.xlu0 %361
        %v364 = vlaneseq
        %v365 = vshrl.u32 %v364, 7
        %v366 = vsub.s32 0, %v365
        %v367 = vrot.slane %v240, %v366
        %v368 = vmul.f32 %v362, %v367
        %369 = vset.pattern.permute.xlu0 1
        %370 = vperm.xlu0 %369, %v358
        %v371 = vpop.permute.xlu0 %370
        %v373 = vlaneseq
        %v374 = vshrl.u32 %v373, 7
        %v375 = vsub.s32 1, %v374
        %v376 = vrot.slane %v240, %v375
        %v377 = vmul.f32 %v371, %v376
        %v378 = vadd.f32 %v368, %v377
        %379 = vset.pattern.permute.xlu0 2
        %380 = vperm.xlu0 %379, %v358
        %v381 = vpop.permute.xlu0 %380
        %v383 = vlaneseq
        %v384 = vshrl.u32 %v383, 7
        %v385 = vsub.s32 2, %v384
        %v386 = vrot.slane %v240, %v385
        %v387 = vmul.f32 %v381, %v386
        %v388 = vadd.f32 %v378, %v387
        %389 = vset.pattern.permute.xlu0 3
        %390 = vperm.xlu0 %389, %v358
        %v391 = vpop.permute.xlu0 %390
        %v393 = vlaneseq
        %v394 = vshrl.u32 %v393, 7
        %v395 = vsub.s32 3, %v394
        %v396 = vrot.slane %v240, %v395
        %v397 = vmul.f32 %v391, %v396
        %v398 = vadd.f32 %v388, %v397
        %v399 = vlaneseq
        %v400 = vshrl.u32 %v399, 7
        %v401 = vsub.s32 5, %v400
        %v402 = vrot.slane %v240, %v401
        %v403 = vadd.f32 %v398, %v402
        %404 = vadd.xlane.f32.xlu0 %v403
        %v405 = vpop.xlane.xlu0 %404
        %v406 = vmul.f32 %v405, %v338
        %v407 = vsub.f32 %v403, %v406
        %v408 = vmul.f32 %v407, %v407
        %409 = vadd.xlane.f32.xlu0 %v408
        %v410 = vpop.xlane.xlu0 %409
        %v411 = vmul.f32 %v410, %v338
        %v412 = vadd.f32 %v411, 1e-05
        %v413 = vrsqrt.pop %v412
        %v414 = vmul.f32 %v407, %v413
        %v415 = vlaneseq
        %v416 = vshrl.u32 %v415, 7
        %v417 = vsub.s32 0, %v416
        %v418 = vrot.slane %v241, %v417
        %v419 = vmul.f32 %v414, %v418
        %v420 = vlaneseq
        %v421 = vshrl.u32 %v420, 7
        %v422 = vsub.s32 1, %v421
        %v423 = vrot.slane %v241, %v422
        %v424 = vadd.f32 %v419, %v423
        %v425 = vadd.f32 %v357, %v424
        %426 = vst [vmem:[%s231] sm:$0xff] %v425
        %s427 = sand.u32 %s122, 1
        %s428 = scalar_lea.sflag [#allocation4], %s427
        %s429 = sand.u32 %s122, 1
        %s430 = smul.addr %s429, 8
        %s431 = scalar_lea.vmem [#allocation7], %s430
        // Predicated region
        $region45: #{tpu_custom_call.1} parent=35 // pred_check
          %p432 = pneg %p132
        $region46: #{tpu_custom_call.1} parent=35 // pred_check_branch
          %434 = sbr.rel (%p432) target = $region48
        $region47: #{tpu_custom_call.1} parent=35 // pred_region
          %s436 = ssub.s32 128, 128
          %437 = vsyncadd %s428, %s436
          %s438 = smul.addr %s20, 128
          %s439 = scalar_lea.hbm %s4, %s438
          %s441 = sshll.u32 %s431, 4
          %s442 = int_to_ptr.vmem [resolvable:$true] %s441
          %444 = dma.vmem_to_hbm [thread:$0]  %s442, 128, %s439, %s428
        $region48: #{tpu_custom_call.1} parent=35 // pred_fallthru
          _
      $region36: #{tpu_custom_call.1} parent=5 // pred_fallthru
        _
      %p445 = scmp.le.s32.totalorder 2, %s15
      // Predicated region
      $region49: #{tpu_custom_call.1} parent=5 // pred_check
        %p446 = pneg %p445
      $region50: #{tpu_custom_call.1} parent=5 // pred_check_branch
        %448 = sbr.rel (%p446) target = $region52
      $region51: #{tpu_custom_call.1} parent=5 // pred_region
        %s449 = ssub.s32 %s15, 2
        // Predicated region
        $region53: #{tpu_custom_call.1} parent=51 // pred_check
          %p450 = pneg %p138
        $region54: #{tpu_custom_call.1} parent=51 // pred_check_branch
          %452 = sbr.rel (%p450) target = $region56
        $region55: #{tpu_custom_call.1} parent=51 // pred_region
          %s453 = sand.u32 %s123, 1
          %s454 = scalar_lea.sflag [#allocation4], %s453
          %s455 = sand.u32 %s123, 1
          %s456 = smul.addr %s455, 8
          %s457 = scalar_lea.vmem [#allocation7], %s456
          %458 = dma.done %s454, 128
        $region56: #{tpu_custom_call.1} parent=51 // pred_fallthru
          _
      $region52: #{tpu_custom_call.1} parent=5 // pred_fallthru
        _
    $region6: #{tpu_custom_call.1} parent=1 // loop_footer
      %s19 = sadd.s32 1, %s15
    $region7: #{tpu_custom_call.1} parent=1 // loop_footer_branch
      %14 = sbr.rel target = $region3
    $region8: #{tpu_custom_call.1} parent=1 // loop_exit
      _
    %459 = vsyncpa [#allocation3], 1
    %s460 = scalar_lea.sflag [#allocation3], 1
    %461 = vsyncpa %s460, 1
    %462 = vsyncpa [#allocation6], 1
    %463 = vsyncpa [#allocation4], 1
    %s464 = scalar_lea.sflag [#allocation4], 1
    %465 = vsyncpa %s464, 1

</llo_original>
